<compile_context>
chip_gen: v7x
topology: tpu7x:2x2x1
jax: 0.10.0
libtpu: 0.0.40
codegen_flags: <defaults>
</compile_context>

<pallas_src>
import functools
import math

import jax
import jax.numpy as jnp
from jax.experimental import pallas as pl
from jax.experimental.pallas import tpu as pltpu


def _round_up(x, m):
    return (x + m - 1) // m * m


def cross_attention_kernel(text_ref, img_ref, ecg_ref,
                           wq_ref, bq_ref,
                           wk_img_ref, wk_ecg_ref, bk_ref,
                           wv_img_ref, wv_ecg_ref, bv_ref,
                           out_ref, *, inv_scale):
    bt, sq, dt = text_ref.shape
    _, skv, di = img_ref.shape
    _, _, de = ecg_ref.shape
    hp = wq_ref.shape[1]

    # Collapse the batch dim: every projection becomes one big 2-D MXU matmul
    # (M = bt*sq / bt*skv rows).  Layout-free because skv % 8 == 0.
    t2 = text_ref[...].reshape(bt * sq, dt)
    im2 = img_ref[...].reshape(bt * skv, di)
    ec2 = ecg_ref[...].reshape(bt * skv, de)

    # Linear projections (MXU, f32 accumulation).  Split-weight K/V == concat.
    q2 = jnp.dot(t2, wq_ref[...], preferred_element_type=jnp.float32) + bq_ref[...]
    k2 = (jnp.dot(im2, wk_img_ref[...], preferred_element_type=jnp.float32)
          + jnp.dot(ec2, wk_ecg_ref[...], preferred_element_type=jnp.float32)
          + bk_ref[...])
    v2 = (jnp.dot(im2, wv_img_ref[...], preferred_element_type=jnp.float32)
          + jnp.dot(ec2, wv_ecg_ref[...], preferred_element_type=jnp.float32)
          + bv_ref[...])

    q = q2.reshape(bt, sq, hp)
    k = k2.reshape(bt, skv, hp)
    v = v2.reshape(bt, skv, hp)

    # attn_scores = Q @ K^T * (1/sqrt(hidden_dim)); the contraction runs over
    # the lane (h) dim of both operands so K is consumed without a transpose.
    scores = jnp.einsum('bqh,bkh->bqk', q, k,
                        preferred_element_type=jnp.float32) * inv_scale

    # Numerically stable softmax along the key dim; denominator reciprocal on
    # the (otherwise idle) EUP slot.
    m = jnp.max(scores, axis=-1, keepdims=True)
    e = jnp.exp(scores - m)
    denom = jnp.sum(e, axis=-1, keepdims=True)
    w = e * pl.reciprocal(denom, approx=True)

    # fused_output = attn_weights @ V  (lane-dense (bt, sq, hp) store)
    out_ref[...] = jnp.einsum('bqk,bkh->bqh', w, v,
                              preferred_element_type=jnp.float32
                              ).astype(out_ref.dtype)


def cross_attention(text_features, image_features, ecg_features, params,
                    *, compute_dtype=jnp.float32, batch_block=None):
    """Pallas CrossAttention forward.

    compute_dtype: jnp.float32 (default) or jnp.bfloat16 for v6e/v7x MXU
    throughput / halved activation+weight DMA bytes (accumulation and softmax
    remain f32 inside the kernel).
    """
    B, Sq, Dt = text_features.shape
    _, Skv, Di = image_features.shape
    _, _, De = ecg_features.shape
    H = params['wq'].shape[1]
    Hp = _round_up(H, 128)                     # lane-dense hidden dim
    inv_scale = 1.0 / math.sqrt(float(H))      # original H, not padded

    # Split the concat weight and zero-pad the hidden dim to Hp columns.
    def pad_h(w):
        return jnp.pad(w, ((0, 0), (0, Hp - H))) if Hp != H else w

    wq, bq = pad_h(params['wq']), pad_h(params['bq'])
    wk_img, wk_ecg, bk = pad_h(params['wk'][:Di]), pad_h(params['wk'][Di:]), pad_h(params['bk'])
    wv_img, wv_ecg, bv = pad_h(params['wv'][:Di]), pad_h(params['wv'][Di:]), pad_h(params['bv'])

    cast = lambda x: x.astype(compute_dtype)
    text_features, image_features, ecg_features = map(
        cast, (text_features, image_features, ecg_features))
    wq, bq, wk_img, wk_ecg, bk, wv_img, wv_ecg, bv = map(
        cast, (wq, bq, wk_img, wk_ecg, bk, wv_img, wv_ecg, bv))

    # Pick the batch block so double-buffered activation + output blocks stay
    # well inside scoped VMEM on every generation (v7x has only 64 MiB/TC).
    el = jnp.dtype(compute_dtype).itemsize
    per_batch = (Sq * Dt + Skv * (Di + De)) * el + Sq * Hp * 4
    if batch_block is None:
        budget = 8 << 20
        batch_block = max(1, min(B, 128, budget // max(2 * per_batch, 1)))
    Bt = int(min(batch_block, B))
    grid = (pl.cdiv(B, Bt),)

    weight_bytes = (Dt + 2 * (Di + De) + 3) * Hp * el
    vmem_est = 2 * 2 * Bt * per_batch + weight_bytes   # 2x double-buffering
    cp_kwargs = dict(dimension_semantics=("parallel",))
    if vmem_est > (12 << 20):
        cp_kwargs["vmem_limit_bytes"] = int(min(64 << 20, 1.5 * vmem_est))

    kernel = functools.partial(cross_attention_kernel, inv_scale=inv_scale)
    full2d = lambda shape: pl.BlockSpec(shape, lambda b: (0, 0))

    out = pl.pallas_call(
        kernel,
        out_shape=jax.ShapeDtypeStruct((B, Sq, Hp), jnp.float32),
        grid_spec=pltpu.PrefetchScalarGridSpec(
            num_scalar_prefetch=0,
            grid=grid,
            in_specs=[
                pl.BlockSpec((Bt, Sq, Dt), lambda b: (b, 0, 0)),   # text
                pl.BlockSpec((Bt, Skv, Di), lambda b: (b, 0, 0)),  # image
                pl.BlockSpec((Bt, Skv, De), lambda b: (b, 0, 0)),  # ecg
                full2d((Dt, Hp)),   # Wq
                full2d((1, Hp)),    # bq
                full2d((Di, Hp)),   # Wk (image rows)
                full2d((De, Hp)),   # Wk (ecg rows)
                full2d((1, Hp)),    # bk
                full2d((Di, Hp)),   # Wv (image rows)
                full2d((De, Hp)),   # Wv (ecg rows)
                full2d((1, Hp)),    # bv
            ],
            out_specs=pl.BlockSpec((Bt, Sq, Hp), lambda b: (b, 0, 0)),
        ),
        compiler_params=pltpu.CompilerParams(**cp_kwargs),
    )(text_features, image_features, ecg_features,
      wq, bq, wk_img, wk_ecg, bk, wv_img, wv_ecg, bv)

    out = out[..., :H]                 # drop the zero padding
    # torch: fused_output.squeeze(1) — only squeezes when Sq == 1.
    if Sq == 1:
        out = out.reshape(B, H)
    return out


def cross_attention_ref(text_features, image_features, ecg_features, params):
    """Plain-JAX reference mirroring the PyTorch forward."""
    H = params['wq'].shape[1]
    q = text_features @ params['wq'] + params['bq'][0]
    cat = jnp.concatenate([image_features, ecg_features], axis=-1)
    k = cat @ params['wk'] + params['bk'][0]
    v = cat @ params['wv'] + params['bv'][0]
    scores = jnp.einsum('bqh,bkh->bqk', q, k) / jnp.sqrt(jnp.float32(H))
    w = jax.nn.softmax(scores, axis=-1)
    out = jnp.einsum('bqk,bkh->bqh', w, v)
    if out.shape[1] == 1:
        out = out[:, 0, :]
    return out


if __name__ == "__main__":
    # Small, forward-consistent shapes.
    B, Sq, Skv = 2, 1, 8
    text_hidden, image_hidden, ecg_hidden, hidden_dim = 32, 32, 16, 32

    key = jax.random.PRNGKey(0)
    ks = jax.random.split(key, 9)

    # Deterministic synthetic parameters (nn.Linear: weight (out,in), bias (out,));
    # stored transposed as (in, out) for right-matmul convenience.
    params = {
        'wq': jax.random.normal(ks[0], (text_hidden, hidden_dim), jnp.float32) * 0.05,
        'bq': jax.random.normal(ks[1], (1, hidden_dim), jnp.float32) * 0.05,
        'wk': jax.random.normal(ks[2], (image_hidden + ecg_hidden, hidden_dim), jnp.float32) * 0.05,
        'bk': jax.random.normal(ks[3], (1, hidden_dim), jnp.float32) * 0.05,
        'wv': jax.random.normal(ks[4], (image_hidden + ecg_hidden, hidden_dim), jnp.float32) * 0.05,
        'bv': jax.random.normal(ks[5], (1, hidden_dim), jnp.float32) * 0.05,
    }

    text_features = jax.random.normal(ks[6], (B, Sq, text_hidden), jnp.float32)
    image_features = jax.random.normal(ks[7], (B, Skv, image_hidden), jnp.float32)
    ecg_features = jax.random.normal(ks[8], (B, Skv, ecg_hidden), jnp.float32)

    out = cross_attention(text_features, image_features, ecg_features, params)
    jax.block_until_ready(out)

    ref = cross_attention_ref(text_features, image_features, ecg_features, params)
    assert out.shape == (B, hidden_dim), out.shape
    # Tolerance accounts for the EUP approximate reciprocal in the softmax.
    assert jnp.allclose(out, ref, atol=5e-3, rtol=5e-3), \
        float(jnp.max(jnp.abs(out - ref)))

    print("KERNEL_OK")
</pallas_src>

<mosaic_0001>
module attributes {stable_mosaic.version = 11 : i64} {
  func.func @cross_attention_kernel(%arg0: i32, %arg1: memref<2x1x32xf32, #tpu.memory_space<vmem>>, %arg2: memref<2x8x32xf32, #tpu.memory_space<vmem>>, %arg3: memref<2x8x16xf32, #tpu.memory_space<vmem>>, %arg4: memref<32x128xf32, #tpu.memory_space<vmem>>, %arg5: memref<1x128xf32, #tpu.memory_space<vmem>>, %arg6: memref<32x128xf32, #tpu.memory_space<vmem>>, %arg7: memref<16x128xf32, #tpu.memory_space<vmem>>, %arg8: memref<1x128xf32, #tpu.memory_space<vmem>>, %arg9: memref<32x128xf32, #tpu.memory_space<vmem>>, %arg10: memref<16x128xf32, #tpu.memory_space<vmem>>, %arg11: memref<1x128xf32, #tpu.memory_space<vmem>>, %arg12: memref<2x1x128xf32, #tpu.memory_space<vmem>>) attributes {dimension_semantics = [#tpu.dimension_semantics<parallel>], iteration_bounds = array<i64: 1>, scalar_prefetch = 0 : i64, scratch_operands = 0 : i64, tpu.core_type = #tpu.core_type<tc>, window_params = [{transform_indices = @transform_0, window_bounds = array<i64: 2, 1, 32>}, {transform_indices = @transform_1, window_bounds = array<i64: 2, 8, 32>}, {transform_indices = @transform_2, window_bounds = array<i64: 2, 8, 16>}, {pipeline_mode = #tpu.pipeline_mode<synchronous>, transform_indices = @transform_3, window_bounds = array<i64: 32, 128>}, {pipeline_mode = #tpu.pipeline_mode<synchronous>, transform_indices = @transform_4, window_bounds = array<i64: 1, 128>}, {pipeline_mode = #tpu.pipeline_mode<synchronous>, transform_indices = @transform_5, window_bounds = array<i64: 32, 128>}, {pipeline_mode = #tpu.pipeline_mode<synchronous>, transform_indices = @transform_6, window_bounds = array<i64: 16, 128>}, {pipeline_mode = #tpu.pipeline_mode<synchronous>, transform_indices = @transform_7, window_bounds = array<i64: 1, 128>}, {pipeline_mode = #tpu.pipeline_mode<synchronous>, transform_indices = @transform_8, window_bounds = array<i64: 32, 128>}, {pipeline_mode = #tpu.pipeline_mode<synchronous>, transform_indices = @transform_9, window_bounds = array<i64: 16, 128>}, {pipeline_mode = #tpu.pipeline_mode<synchronous>, transform_indices = @transform_10, window_bounds = array<i64: 1, 128>}, {transform_indices = @transform_11, window_bounds = array<i64: 2, 1, 128>}]} {
    %c0 = arith.constant 0 : index
    %c0_0 = arith.constant 0 : index
    %c0_1 = arith.constant 0 : index
    %0 = vector.load %arg1[%c0, %c0_0, %c0_1] : memref<2x1x32xf32, #tpu.memory_space<vmem>>, vector<2x1x32xf32>
    %1 = vector.shape_cast %0 : vector<2x1x32xf32> to vector<2x32xf32>
    %c0_2 = arith.constant 0 : index
    %c0_3 = arith.constant 0 : index
    %c0_4 = arith.constant 0 : index
    %2 = vector.load %arg2[%c0_2, %c0_3, %c0_4] : memref<2x8x32xf32, #tpu.memory_space<vmem>>, vector<2x8x32xf32>
    %3 = vector.shape_cast %2 : vector<2x8x32xf32> to vector<16x32xf32>
    %c0_5 = arith.constant 0 : index
    %c0_6 = arith.constant 0 : index
    %c0_7 = arith.constant 0 : index
    %4 = vector.load %arg3[%c0_5, %c0_6, %c0_7] : memref<2x8x16xf32, #tpu.memory_space<vmem>>, vector<2x8x16xf32>
    %5 = vector.shape_cast %4 : vector<2x8x16xf32> to vector<16x16xf32>
    %c0_8 = arith.constant 0 : index
    %c0_9 = arith.constant 0 : index
    %6 = vector.load %arg4[%c0_8, %c0_9] : memref<32x128xf32, #tpu.memory_space<vmem>>, vector<32x128xf32>
    %cst = arith.constant dense<0.000000e+00> : vector<2x128xf32>
    %7 = tpu.matmul %1, %6, %cst {dimension_numbers = #tpu.dot_dimension_numbers<[1], [0], [0], [1], [0, 0, 1, 1], [], []>} : vector<2x32xf32>, vector<32x128xf32>, vector<2x128xf32> -> vector<2x128xf32>
    %c0_10 = arith.constant 0 : index
    %c0_11 = arith.constant 0 : index
    %8 = vector.load %arg5[%c0_10, %c0_11] : memref<1x128xf32, #tpu.memory_space<vmem>>, vector<1x128xf32>
    %9 = vector.broadcast %8 : vector<1x128xf32> to vector<2x128xf32>
    %10 = arith.addf %7, %9 : vector<2x128xf32>
    %c0_12 = arith.constant 0 : index
    %c0_13 = arith.constant 0 : index
    %11 = vector.load %arg6[%c0_12, %c0_13] : memref<32x128xf32, #tpu.memory_space<vmem>>, vector<32x128xf32>
    %cst_14 = arith.constant dense<0.000000e+00> : vector<16x128xf32>
    %12 = tpu.matmul %3, %11, %cst_14 {dimension_numbers = #tpu.dot_dimension_numbers<[1], [0], [0], [1], [0, 0, 1, 1], [], []>} : vector<16x32xf32>, vector<32x128xf32>, vector<16x128xf32> -> vector<16x128xf32>
    %c0_15 = arith.constant 0 : index
    %c0_16 = arith.constant 0 : index
    %13 = vector.load %arg7[%c0_15, %c0_16] : memref<16x128xf32, #tpu.memory_space<vmem>>, vector<16x128xf32>
    %cst_17 = arith.constant dense<0.000000e+00> : vector<16x128xf32>
    %14 = tpu.matmul %5, %13, %cst_17 {dimension_numbers = #tpu.dot_dimension_numbers<[1], [0], [0], [1], [0, 0, 1, 1], [], []>} : vector<16x16xf32>, vector<16x128xf32>, vector<16x128xf32> -> vector<16x128xf32>
    %15 = arith.addf %12, %14 : vector<16x128xf32>
    %c0_18 = arith.constant 0 : index
    %c0_19 = arith.constant 0 : index
    %16 = vector.load %arg8[%c0_18, %c0_19] : memref<1x128xf32, #tpu.memory_space<vmem>>, vector<1x128xf32>
    %17 = vector.broadcast %16 : vector<1x128xf32> to vector<16x128xf32>
    %18 = arith.addf %15, %17 : vector<16x128xf32>
    %c0_20 = arith.constant 0 : index
    %c0_21 = arith.constant 0 : index
    %19 = vector.load %arg9[%c0_20, %c0_21] : memref<32x128xf32, #tpu.memory_space<vmem>>, vector<32x128xf32>
    %cst_22 = arith.constant dense<0.000000e+00> : vector<16x128xf32>
    %20 = tpu.matmul %3, %19, %cst_22 {dimension_numbers = #tpu.dot_dimension_numbers<[1], [0], [0], [1], [0, 0, 1, 1], [], []>} : vector<16x32xf32>, vector<32x128xf32>, vector<16x128xf32> -> vector<16x128xf32>
    %c0_23 = arith.constant 0 : index
    %c0_24 = arith.constant 0 : index
    %21 = vector.load %arg10[%c0_23, %c0_24] : memref<16x128xf32, #tpu.memory_space<vmem>>, vector<16x128xf32>
    %cst_25 = arith.constant dense<0.000000e+00> : vector<16x128xf32>
    %22 = tpu.matmul %5, %21, %cst_25 {dimension_numbers = #tpu.dot_dimension_numbers<[1], [0], [0], [1], [0, 0, 1, 1], [], []>} : vector<16x16xf32>, vector<16x128xf32>, vector<16x128xf32> -> vector<16x128xf32>
    %23 = arith.addf %20, %22 : vector<16x128xf32>
    %c0_26 = arith.constant 0 : index
    %c0_27 = arith.constant 0 : index
    %24 = vector.load %arg11[%c0_26, %c0_27] : memref<1x128xf32, #tpu.memory_space<vmem>>, vector<1x128xf32>
    %25 = vector.broadcast %24 : vector<1x128xf32> to vector<16x128xf32>
    %26 = arith.addf %23, %25 : vector<16x128xf32>
    %27 = vector.shape_cast %10 : vector<2x128xf32> to vector<2x1x128xf32>
    %28 = vector.shape_cast %18 : vector<16x128xf32> to vector<2x8x128xf32>
    %29 = vector.shape_cast %26 : vector<16x128xf32> to vector<2x8x128xf32>
    "tpu.trace_start"() <{level = 10 : i32, message = "bqh,bkh->bqk"}> : () -> ()
    %cst_28 = arith.constant dense<0.000000e+00> : vector<2x1x8xf32>
    %30 = tpu.matmul %27, %28, %cst_28 {dimension_numbers = #tpu.dot_dimension_numbers<[2], [2], [1], [1], [0, 0, 0, 1, 1, 1], [0], [0]>} : vector<2x1x128xf32>, vector<2x8x128xf32>, vector<2x1x8xf32> -> vector<2x1x8xf32>
    "tpu.trace_stop"() : () -> ()
    %cst_29 = arith.constant 0.176776692 : f32
    %31 = vector.broadcast %cst_29 : f32 to vector<2x1x8xf32>
    %32 = arith.mulf %30, %31 : vector<2x1x8xf32>
    %cst_30 = arith.constant dense<0xFF800000> : vector<2x1xf32>
    %33 = vector.multi_reduction <maximumf>, %32, %cst_30 [2] : vector<2x1x8xf32> to vector<2x1xf32>
    %34 = vector.shape_cast %33 : vector<2x1xf32> to vector<2x1x1xf32>
    %35 = vector.broadcast %34 : vector<2x1x1xf32> to vector<2x1x8xf32>
    %36 = arith.subf %32, %35 : vector<2x1x8xf32>
    %37 = math.exp %36 : vector<2x1x8xf32>
    %cst_31 = arith.constant dense<0.000000e+00> : vector<2x1xf32>
    %38 = vector.multi_reduction <add>, %37, %cst_31 [2] : vector<2x1x8xf32> to vector<2x1xf32>
    %39 = vector.shape_cast %38 : vector<2x1xf32> to vector<2x1x1xf32>
    %40 = tpu.reciprocal %39 {approx = true} : vector<2x1x1xf32> -> vector<2x1x1xf32>
    %41 = vector.broadcast %40 : vector<2x1x1xf32> to vector<2x1x8xf32>
    %42 = arith.mulf %37, %41 : vector<2x1x8xf32>
    "tpu.trace_start"() <{level = 10 : i32, message = "bqk,bkh->bqh"}> : () -> ()
    %cst_32 = arith.constant dense<0.000000e+00> : vector<2x1x128xf32>
    %43 = tpu.matmul %42, %29, %cst_32 {dimension_numbers = #tpu.dot_dimension_numbers<[2], [1], [1], [2], [0, 0, 0, 1, 1, 2], [0], [0]>} : vector<2x1x8xf32>, vector<2x8x128xf32>, vector<2x1x128xf32> -> vector<2x1x128xf32>
    "tpu.trace_stop"() : () -> ()
    %c0_33 = arith.constant 0 : index
    %c0_34 = arith.constant 0 : index
    %c0_35 = arith.constant 0 : index
    %44 = vector.load %arg12[%c0_33, %c0_34, %c0_35] : memref<2x1x128xf32, #tpu.memory_space<vmem>>, vector<2x1x128xf32>
    tpu.vector_store %arg12[%c0_33, %c0_34, %c0_35], %43 {strides = array<i32>} : memref<2x1x128xf32, #tpu.memory_space<vmem>>, vector<2x1x128xf32>,
    return
  }
  func.func @transform_0(%arg0: i32) -> (i32, i32, i32) {
    %c0_i32 = arith.constant 0 : i32
    %c0_i32_0 = arith.constant 0 : i32
    %c0_i32_1 = arith.constant 0 : i32
    return %arg0, %c0_i32, %c0_i32_0 : i32, i32, i32
  }
  func.func @transform_1(%arg0: i32) -> (i32, i32, i32) {
    %c0_i32 = arith.constant 0 : i32
    %c0_i32_0 = arith.constant 0 : i32
    %c0_i32_1 = arith.constant 0 : i32
    return %arg0, %c0_i32, %c0_i32_0 : i32, i32, i32
  }
  func.func @transform_2(%arg0: i32) -> (i32, i32, i32) {
    %c0_i32 = arith.constant 0 : i32
    %c0_i32_0 = arith.constant 0 : i32
    %c0_i32_1 = arith.constant 0 : i32
    return %arg0, %c0_i32, %c0_i32_0 : i32, i32, i32
  }
  func.func @transform_3(%arg0: i32) -> (i32, i32) {
    %c0_i32 = arith.constant 0 : i32
    %c0_i32_0 = arith.constant 0 : i32
    %c0_i32_1 = arith.constant 0 : i32
    return %c0_i32, %c0_i32_0 : i32, i32
  }
  func.func @transform_4(%arg0: i32) -> (i32, i32) {
    %c0_i32 = arith.constant 0 : i32
    %c0_i32_0 = arith.constant 0 : i32
    %c0_i32_1 = arith.constant 0 : i32
    return %c0_i32, %c0_i32_0 : i32, i32
  }
  func.func @transform_5(%arg0: i32) -> (i32, i32) {
    %c0_i32 = arith.constant 0 : i32
    %c0_i32_0 = arith.constant 0 : i32
    %c0_i32_1 = arith.constant 0 : i32
    return %c0_i32, %c0_i32_0 : i32, i32
  }
  func.func @transform_6(%arg0: i32) -> (i32, i32) {
    %c0_i32 = arith.constant 0 : i32
    %c0_i32_0 = arith.constant 0 : i32
    %c0_i32_1 = arith.constant 0 : i32
    return %c0_i32, %c0_i32_0 : i32, i32
  }
  func.func @transform_7(%arg0: i32) -> (i32, i32) {
    %c0_i32 = arith.constant 0 : i32
    %c0_i32_0 = arith.constant 0 : i32
    %c0_i32_1 = arith.constant 0 : i32
    return %c0_i32, %c0_i32_0 : i32, i32
  }
  func.func @transform_8(%arg0: i32) -> (i32, i32) {
    %c0_i32 = arith.constant 0 : i32
    %c0_i32_0 = arith.constant 0 : i32
    %c0_i32_1 = arith.constant 0 : i32
    return %c0_i32, %c0_i32_0 : i32, i32
  }
  func.func @transform_9(%arg0: i32) -> (i32, i32) {
    %c0_i32 = arith.constant 0 : i32
    %c0_i32_0 = arith.constant 0 : i32
    %c0_i32_1 = arith.constant 0 : i32
    return %c0_i32, %c0_i32_0 : i32, i32
  }
  func.func @transform_10(%arg0: i32) -> (i32, i32) {
    %c0_i32 = arith.constant 0 : i32
    %c0_i32_0 = arith.constant 0 : i32
    %c0_i32_1 = arith.constant 0 : i32
    return %c0_i32, %c0_i32_0 : i32, i32
  }
  func.func @transform_11(%arg0: i32) -> (i32, i32, i32) {
    %c0_i32 = arith.constant 0 : i32
    %c0_i32_0 = arith.constant 0 : i32
    %c0_i32_1 = arith.constant 0 : i32
    return %arg0, %c0_i32, %c0_i32_0 : i32, i32, i32
  }
}

</mosaic_0001>

<llo_original>
// kernel: tpu_custom_call.1
$region0: #{tpu_custom_call.1}
  #allocation0 [shape = 'u32[]', space=smem, size = 0x4, offset = 0x4, fixed_abs, tag = 'smem constant byte address 0x4 - core index']
  #allocation1 [shape = 'u32[144,128]{1,0:T(1,128)}', space=vmem, size = 0x12000, scoped, tag = 'internal scratch']
  %s0 = inlined_call_operand.hbm [shape: f32[2,1,32], index: 0, kind: input, shape index: {}]
  %s1 = inlined_call_operand.hbm [shape: f32[2,8,32], index: 1, kind: input, shape index: {}]
  %s2 = inlined_call_operand.hbm [shape: f32[2,8,16], index: 2, kind: input, shape index: {}]
  %s3 = inlined_call_operand.hbm [shape: f32[32,128], index: 3, kind: input, shape index: {}]
  %s4 = inlined_call_operand.vmem [shape: f32[1,128], index: 4, kind: input, shape index: {}]
  %s5 = inlined_call_operand.hbm [shape: f32[32,128], index: 5, kind: input, shape index: {}]
  %s6 = inlined_call_operand.vmem [shape: f32[16,128], index: 6, kind: input, shape index: {}]
  %s7 = inlined_call_operand.vmem [shape: f32[1,128], index: 7, kind: input, shape index: {}]
  %s8 = inlined_call_operand.hbm [shape: f32[32,128], index: 8, kind: input, shape index: {}]
  %s9 = inlined_call_operand.vmem [shape: f32[16,128], index: 9, kind: input, shape index: {}]
  %s10 = inlined_call_operand.vmem [shape: f32[1,128], index: 10, kind: input, shape index: {}]
  %s11 = inlined_call_operand.hbm [shape: f32[2,1,128], index: 11, kind: output, shape index: {}]
  %s12 = sld [smem:[#allocation0]]
  $region78: #{tpu_custom_call.1} parent=0
    _
  %s14 = ssub.s32 1, %s12
  %s15 = scalar_select 0, %s14, %s12
  $region1: #{tpu_custom_call.1} parent=0
    #allocation2 [shape = 'u8[1024]{0}', space=vmem, size = 0x400, scoped, tag = 'input window, operand 0, single buffered']
    #allocation3 [shape = 's32[1]{0}', space=sflag, size = 0x4, scoped, tag = 'scoped memory for tpu_custom_call.1']
    #allocation4 [shape = 's32[1]{0}', space=sflag, size = 0x4, scoped, tag = 'scoped memory for tpu_custom_call.1']
    #allocation5 [shape = 'u8[8192]{0}', space=vmem, size = 0x2000, scoped, tag = 'input window, operand 1, single buffered']
    #allocation6 [shape = 's32[1]{0}', space=sflag, size = 0x4, scoped, tag = 'scoped memory for tpu_custom_call.1']
    #allocation7 [shape = 'u8[8192]{0}', space=vmem, size = 0x2000, scoped, tag = 'input window, operand 2, single buffered']
    #allocation8 [shape = 'u8[16384]{0}', space=vmem, size = 0x4000, scoped, tag = 'input window, operand 3, single buffered']
    #allocation9 [shape = 's32[1]{0}', space=sflag, size = 0x4, scoped, tag = 'scoped memory for tpu_custom_call.1']
    #allocation10 [shape = 'u8[16384]{0}', space=vmem, size = 0x4000, scoped, tag = 'input window, operand 5, single buffered']
    #allocation11 [shape = 'u8[16384]{0}', space=vmem, size = 0x4000, scoped, tag = 'input window, operand 8, single buffered']
    #allocation12 [shape = 's32[1]{0}', space=sflag, size = 0x4, scoped, tag = 'scoped memory for tpu_custom_call.1']
    #allocation13 [shape = 'u8[1024]{0}', space=vmem, size = 0x400, scoped, tag = 'output window, operand 0, single buffered']
    %16 = vsyncpa [#allocation3], 0
    %17 = vsyncpa [#allocation6], 0
    %18 = vsyncpa [#allocation9], 0
    %19 = vsyncpa [#allocation12], 0
    %20 = vsyncpa [#allocation4], 0
    // Predicated region
    $region2: #{tpu_custom_call.1} parent=1 // pred_check
      _
    $region3: #{tpu_custom_call.1} parent=1 // pred_check_branch
      %22 = sbr.rel (0) target = $region5
    $region4: #{tpu_custom_call.1} parent=1 // pred_region
      %s24 = ssub.s32 32, 32
      %25 = vsyncadd [#allocation3], %s24
      %s26 = sshll.u32 [#allocation2], 4
      %s27 = int_to_ptr.vmem [resolvable:$true] %s26
      %32 = dma.hbm_to_vmem [thread:$0]  %s0, 32, %s27, [#allocation3], 16, 16, 1
    $region5: #{tpu_custom_call.1} parent=1 // pred_fallthru
      _
    // Predicated region
    $region6: #{tpu_custom_call.1} parent=1 // pred_check
      _
    $region7: #{tpu_custom_call.1} parent=1 // pred_check_branch
      %34 = sbr.rel (0) target = $region9
    $region8: #{tpu_custom_call.1} parent=1 // pred_region
      %s36 = ssub.s32 256, 256
      %37 = vsyncadd [#allocation6], %s36
      %s38 = sshll.u32 [#allocation5], 4
      %s39 = int_to_ptr.vmem [resolvable:$true] %s38
      %44 = dma.hbm_to_vmem [thread:$0]  %s1, 256, %s39, [#allocation6], 128, 128, 8
    $region9: #{tpu_custom_call.1} parent=1 // pred_fallthru
      _
    // Predicated region
    $region10: #{tpu_custom_call.1} parent=1 // pred_check
      _
    $region11: #{tpu_custom_call.1} parent=1 // pred_check_branch
      %46 = sbr.rel (0) target = $region13
    $region12: #{tpu_custom_call.1} parent=1 // pred_region
      %s48 = ssub.s32 256, 256
      %49 = vsyncadd [#allocation6], %s48
      %s50 = sshll.u32 [#allocation7], 4
      %s51 = int_to_ptr.vmem [resolvable:$true] %s50
      %56 = dma.hbm_to_vmem [thread:$0]  %s2, 256, %s51, [#allocation6], 128, 128, 8
    $region13: #{tpu_custom_call.1} parent=1 // pred_fallthru
      _
    // Predicated region
    $region14: #{tpu_custom_call.1} parent=1 // pred_check
      _
    $region15: #{tpu_custom_call.1} parent=1 // pred_check_branch
      %58 = sbr.rel (0) target = $region17
    $region16: #{tpu_custom_call.1} parent=1 // pred_region
      %s60 = ssub.s32 512, 512
      %61 = vsyncadd [#allocation9], %s60
      %s62 = sshll.u32 [#allocation8], 4
      %s63 = int_to_ptr.vmem [resolvable:$true] %s62
      %68 = dma.hbm_to_vmem [thread:$0]  %s3, 512, %s63, [#allocation9], 128, 128, 8
    $region17: #{tpu_custom_call.1} parent=1 // pred_fallthru
      _
    // Predicated region
    $region18: #{tpu_custom_call.1} parent=1 // pred_check
      _
    $region19: #{tpu_custom_call.1} parent=1 // pred_check_branch
      %70 = sbr.rel (0) target = $region21
    $region20: #{tpu_custom_call.1} parent=1 // pred_region
      _
    $region21: #{tpu_custom_call.1} parent=1 // pred_fallthru
      _
    // Predicated region
    $region22: #{tpu_custom_call.1} parent=1 // pred_check
      _
    $region23: #{tpu_custom_call.1} parent=1 // pred_check_branch
      %72 = sbr.rel (0) target = $region25
    $region24: #{tpu_custom_call.1} parent=1 // pred_region
      %s74 = ssub.s32 512, 512
      %75 = vsyncadd [#allocation9], %s74
      %s76 = sshll.u32 [#allocation10], 4
      %s77 = int_to_ptr.vmem [resolvable:$true] %s76
      %82 = dma.hbm_to_vmem [thread:$0]  %s5, 512, %s77, [#allocation9], 128, 128, 8
    $region25: #{tpu_custom_call.1} parent=1 // pred_fallthru
      _
    // Predicated region
    $region26: #{tpu_custom_call.1} parent=1 // pred_check
      _
    $region27: #{tpu_custom_call.1} parent=1 // pred_check_branch
      %84 = sbr.rel (0) target = $region29
    $region28: #{tpu_custom_call.1} parent=1 // pred_region
      _
    $region29: #{tpu_custom_call.1} parent=1 // pred_fallthru
      _
    // Predicated region
    $region30: #{tpu_custom_call.1} parent=1 // pred_check
      _
    $region31: #{tpu_custom_call.1} parent=1 // pred_check_branch
      %86 = sbr.rel (0) target = $region33
    $region32: #{tpu_custom_call.1} parent=1 // pred_region
      _
    $region33: #{tpu_custom_call.1} parent=1 // pred_fallthru
      _
    // Predicated region
    $region34: #{tpu_custom_call.1} parent=1 // pred_check
      _
    $region35: #{tpu_custom_call.1} parent=1 // pred_check_branch
      %88 = sbr.rel (0) target = $region37
    $region36: #{tpu_custom_call.1} parent=1 // pred_region
      %s90 = ssub.s32 512, 512
      %91 = vsyncadd [#allocation12], %s90
      %s92 = sshll.u32 [#allocation11], 4
      %s93 = int_to_ptr.vmem [resolvable:$true] %s92
      %98 = dma.hbm_to_vmem [thread:$0]  %s8, 512, %s93, [#allocation12], 128, 128, 8
    $region37: #{tpu_custom_call.1} parent=1 // pred_fallthru
      _
    // Predicated region
    $region38: #{tpu_custom_call.1} parent=1 // pred_check
      _
    $region39: #{tpu_custom_call.1} parent=1 // pred_check_branch
      %100 = sbr.rel (0) target = $region41
    $region40: #{tpu_custom_call.1} parent=1 // pred_region
      _
    $region41: #{tpu_custom_call.1} parent=1 // pred_fallthru
      _
    // Predicated region
    $region42: #{tpu_custom_call.1} parent=1 // pred_check
      _
    $region43: #{tpu_custom_call.1} parent=1 // pred_check_branch
      %102 = sbr.rel (0) target = $region45
    $region44: #{tpu_custom_call.1} parent=1 // pred_region
      _
    $region45: #{tpu_custom_call.1} parent=1 // pred_fallthru
      _
    // Predicated region
    $region46: #{tpu_custom_call.1} parent=1 // pred_check
      _
    $region47: #{tpu_custom_call.1} parent=1 // pred_check_branch
      %104 = sbr.rel (0) target = $region49
    $region48: #{tpu_custom_call.1} parent=1 // pred_region
      %105 = dma.done [#allocation3], 32
    $region49: #{tpu_custom_call.1} parent=1 // pred_fallthru
      _
    // Predicated region
    $region50: #{tpu_custom_call.1} parent=1 // pred_check
      _
    $region51: #{tpu_custom_call.1} parent=1 // pred_check_branch
      %107 = sbr.rel (0) target = $region53
    $region52: #{tpu_custom_call.1} parent=1 // pred_region
      %108 = dma.done [#allocation6], 256
    $region53: #{tpu_custom_call.1} parent=1 // pred_fallthru
      _
    // Predicated region
    $region54: #{tpu_custom_call.1} parent=1 // pred_check
      _
    $region55: #{tpu_custom_call.1} parent=1 // pred_check_branch
      %110 = sbr.rel (0) target = $region57
    $region56: #{tpu_custom_call.1} parent=1 // pred_region
      %111 = dma.done [#allocation6], 256
    $region57: #{tpu_custom_call.1} parent=1 // pred_fallthru
      _
    // Predicated region
    $region58: #{tpu_custom_call.1} parent=1 // pred_check
      _
    $region59: #{tpu_custom_call.1} parent=1 // pred_check_branch
      %113 = sbr.rel (0) target = $region61
    $region60: #{tpu_custom_call.1} parent=1 // pred_region
      %114 = dma.done [#allocation9], 512
    $region61: #{tpu_custom_call.1} parent=1 // pred_fallthru
      _
    // Predicated region
    $region62: #{tpu_custom_call.1} parent=1 // pred_check
      _
    $region63: #{tpu_custom_call.1} parent=1 // pred_check_branch
      %116 = sbr.rel (0) target = $region65
    $region64: #{tpu_custom_call.1} parent=1 // pred_region
      %117 = dma.done [#allocation9], 512
    $region65: #{tpu_custom_call.1} parent=1 // pred_fallthru
      _
    // Predicated region
    $region66: #{tpu_custom_call.1} parent=1 // pred_check
      _
    $region67: #{tpu_custom_call.1} parent=1 // pred_check_branch
      %119 = sbr.rel (0) target = $region69
    $region68: #{tpu_custom_call.1} parent=1 // pred_region
      %120 = dma.done [#allocation12], 512
    $region69: #{tpu_custom_call.1} parent=1 // pred_fallthru
      _
    %v121 = vld [vmem:[#allocation2] sm:$0x1]
    %v122 = vld [vmem:[#allocation2 + $0x1] sm:$0x1]
    %v123 = vld [vmem:[#allocation5] sm:$0xff]
    %v124 = vld [vmem:[#allocation5 + $0x8] sm:$0xff]
    %v125 = vld [vmem:[#allocation7] sm:$0xff]
    %v126 = vld [vmem:[#allocation7 + $0x8] sm:$0xff]
    %v127 = vld [vmem:[#allocation8] sm:$0xff]
    %v128 = vld [vmem:[#allocation8 + $0x8] sm:$0xff]
    %v129 = vld [vmem:[#allocation8 + $0x10] sm:$0xff]
    %v130 = vld [vmem:[#allocation8 + $0x18] sm:$0xff]
    %v131 = vld [vmem:[%s4] sm:$0x1]
    %v133 = vlaneseq
    %v134 = vshrl.u32 %v133, 7
    %v135 = vsub.s32 0, %v134
    %v136 = vrot.slane %v131, %v135
    %v140 = vcombine.low %v121, %v122
    %v142 = vunpack.c.l.s4 1966171168
    %v143 = vunpack.c.0.s8 %v142
    %v144 = vlaneseq
    %v145 = vshrl.u32 %v144, 7
    %v146 = vsub.s32 %v143, %v145
    %v147 = vrot.slane %v140, %v146
    %v149 = vunpack.c.l.s4 1966171168
    %v150 = vunpack.c.0.s8 %v149
    %v151 = vlaneseq
    %v152 = vshrl.u32 %v151, 7
    %v153 = vsub.s32 %v150, %v152
    %v154 = vrot.slane %v147, %v153
    %vm155 = vcmask 261120
    %v156 = vsel %vm155, %v154, 0
    %158 = vmatprep.subr.mxu0 0.0
    %159 = vmatpush1.msra.mxu0 %v127
    %160 = vmatprep.subr.mxu0 0.0
    %161 = vmatpush1.msra.mxu0 %v128
    %162 = vmatprep.subr.mxu0 0.0
    %163 = vmatpush1.msra.mxu0 %v129
    %164 = vmatprep.subr.mxu0 0.0
    %165 = vmatpush1.msra.mxu0 %v130
    %166 = vmatprep.subr.mxu0 0.0
    %167 = vmatpush1.msra.mxu0 0.0
    %168 = vmatprep.subr.mxu0 0.0
    %169 = vmatpush1.msra.mxu0 0.0
    %170 = vmatprep.subr.mxu0 0.0
    %171 = vmatpush1.msra.mxu0 0.0
    %172 = vmatprep.subr.mxu0 0.0
    %173 = vmatpush1.msra.mxu0 0.0
    %174 = vmatprep.subr.mxu0 0.0
    %175 = vmatpush1.msra.mxu0 0.0
    %176 = vmatprep.subr.mxu0 0.0
    %177 = vmatpush1.msra.mxu0 0.0
    %178 = vmatprep.subr.mxu0 0.0
    %179 = vmatpush1.msra.mxu0 0.0
    %180 = vmatprep.subr.mxu0 0.0
    %181 = vmatpush1.msra.mxu0 0.0
    %182 = vmatprep.subr.mxu0 0.0
    %183 = vmatpush1.msra.mxu0 0.0
    %184 = vmatprep.subr.mxu0 0.0
    %185 = vmatpush1.msra.mxu0 0.0
    %186 = vmatprep.subr.mxu0 0.0
    %187 = vmatpush1.msra.mxu0 0.0
    %188 = vmatprep.subr.mxu0 0.0
    %189 = vmatpush1.msra.mxu0 0.0
    %190 = vmatprep.subr.mxu0 0.0
    %191 = vmatpush1.msra.mxu0 0.0
    %192 = vmatprep.subr.mxu0 0.0
    %193 = vmatpush1.msra.mxu0 0.0
    %194 = vmatprep.subr.mxu0 0.0
    %195 = vmatpush1.msra.mxu0 0.0
    %196 = vmatprep.subr.mxu0 0.0
    %197 = vmatpush1.msra.mxu0 0.0
    %198 = vmatprep.subr.mxu0 0.0
    %199 = vmatpush1.msra.mxu0 0.0
    %200 = vmatprep.subr.mxu0 0.0
    %201 = vmatpush1.msra.mxu0 0.0
    %202 = vmatprep.subr.mxu0 0.0
    %203 = vmatpush1.msra.mxu0 0.0
    %204 = vmatprep.subr.mxu0 0.0
    %205 = vmatpush1.msra.mxu0 0.0
    %206 = vmatprep.subr.mxu0 0.0
    %207 = vmatpush1.msra.mxu0 0.0
    %208 = vmatprep.subr.mxu0 0.0
    %209 = vmatpush1.msra.mxu0 0.0
    %210 = vmatprep.subr.mxu0 0.0
    %211 = vmatpush1.msra.mxu0 0.0
    %212 = vmatprep.subr.mxu0 0.0
    %213 = vmatpush1.msra.mxu0 0.0
    %214 = vmatprep.subr.mxu0 0.0
    %215 = vmatpush1.msra.mxu0 0.0
    %216 = vmatprep.subr.mxu0 0.0
    %217 = vmatpush1.msra.mxu0 0.0
    %218 = vmatprep.subr.mxu0 0.0
    %219 = vmatpush1.msra.mxu0 0.0
    %220 = vmatprep.subr.mxu0 0.0
    %221 = vmatpush1.msra.mxu0 0.0
    %222 = vmatprep.mubr.f32.mxu0 0.0
    %223 = vmatmul.mubr.f32.gmra.mrb[0].mxu0 %v156
    %v224 = vpop.f32.mrb[0].mxu0
    %v225 = vadd.f32 %v136, %v224
    %v226 = vpop.f32.mrb[0].mxu0
    %227 = vdwg.mxu0
    %v228 = vld [vmem:[#allocation10] sm:$0xff]
    %v229 = vld [vmem:[#allocation10 + $0x8] sm:$0xff]
    %v230 = vld [vmem:[#allocation10 + $0x10] sm:$0xff]
    %v231 = vld [vmem:[#allocation10 + $0x18] sm:$0xff]
    %v232 = vld [vmem:[%s6] sm:$0xff]
    %v233 = vld [vmem:[%s6 + $0x8] sm:$0xff]
    %vm234 = vcmask 130048
    %v236 = vsel %vm234, %v125, 0
    %v239 = vsel %vm234, %v126, 0
    %241 = vmatprep.subr.mxu0 0.0
    %242 = vmatpush1.msra.mxu0 %v232
    %243 = vmatprep.subr.mxu0 0.0
    %244 = vmatpush1.msra.mxu0 %v233
    %245 = vmatprep.subr.mxu0 0.0
    %246 = vmatpush1.msra.mxu0 0.0
    %247 = vmatprep.subr.mxu0 0.0
    %248 = vmatpush1.msra.mxu0 0.0
    %249 = vmatprep.subr.mxu0 0.0
    %250 = vmatpush1.msra.mxu0 0.0
    %251 = vmatprep.subr.mxu0 0.0
    %252 = vmatpush1.msra.mxu0 0.0
    %253 = vmatprep.subr.mxu0 0.0
    %254 = vmatpush1.msra.mxu0 0.0
    %255 = vmatprep.subr.mxu0 0.0
    %256 = vmatpush1.msra.mxu0 0.0
    %257 = vmatprep.subr.mxu0 0.0
    %258 = vmatpush1.msra.mxu0 0.0
    %259 = vmatprep.subr.mxu0 0.0
    %260 = vmatpush1.msra.mxu0 0.0
    %261 = vmatprep.subr.mxu0 0.0
    %262 = vmatpush1.msra.mxu0 0.0
    %263 = vmatprep.subr.mxu0 0.0
    %264 = vmatpush1.msra.mxu0 0.0
    %265 = vmatprep.subr.mxu0 0.0
    %266 = vmatpush1.msra.mxu0 0.0
    %267 = vmatprep.subr.mxu0 0.0
    %268 = vmatpush1.msra.mxu0 0.0
    %269 = vmatprep.subr.mxu0 0.0
    %270 = vmatpush1.msra.mxu0 0.0
    %271 = vmatprep.subr.mxu0 0.0
    %272 = vmatpush1.msra.mxu0 0.0
    %273 = vmatprep.subr.mxu0 0.0
    %274 = vmatpush1.msra.mxu0 0.0
    %275 = vmatprep.subr.mxu0 0.0
    %276 = vmatpush1.msra.mxu0 0.0
    %277 = vmatprep.subr.mxu0 0.0
    %278 = vmatpush1.msra.mxu0 0.0
    %279 = vmatprep.subr.mxu0 0.0
    %280 = vmatpush1.msra.mxu0 0.0
    %281 = vmatprep.subr.mxu0 0.0
    %282 = vmatpush1.msra.mxu0 0.0
    %283 = vmatprep.subr.mxu0 0.0
    %284 = vmatpush1.msra.mxu0 0.0
    %285 = vmatprep.subr.mxu0 0.0
    %286 = vmatpush1.msra.mxu0 0.0
    %287 = vmatprep.subr.mxu0 0.0
    %288 = vmatpush1.msra.mxu0 0.0
    %289 = vmatprep.subr.mxu0 0.0
    %290 = vmatpush1.msra.mxu0 0.0
    %291 = vmatprep.subr.mxu0 0.0
    %292 = vmatpush1.msra.mxu0 0.0
    %293 = vmatprep.subr.mxu0 0.0
    %294 = vmatpush1.msra.mxu0 0.0
    %295 = vmatprep.subr.mxu0 0.0
    %296 = vmatpush1.msra.mxu0 0.0
    %297 = vmatprep.subr.mxu0 0.0
    %298 = vmatpush1.msra.mxu0 0.0
    %299 = vmatprep.subr.mxu0 0.0
    %300 = vmatpush1.msra.mxu0 0.0
    %301 = vmatprep.subr.mxu0 0.0
    %302 = vmatpush1.msra.mxu0 0.0
    %303 = vmatprep.subr.mxu0 0.0
    %304 = vmatpush1.msra.mxu0 0.0
    %305 = vmatprep.mubr.f32.mxu0 0.0
    %306 = vmatmul.mubr.f32.gmra.mrb[0].mxu0 %v236
    %v307 = vpop.f32.mrb[0].mxu0
    %v308 = vadd.f32 0.0, %v307
    %v309 = vpop.f32.mrb[0].mxu0
    %310 = vmatprep.mubr.f32.mxu0 0.0
    %311 = vmatmul.mubr.f32.gmra.mrb[0].mxu0 %v239
    %v312 = vpop.f32.mrb[0].mxu0
    %v313 = vadd.f32 0.0, %v312
    %v314 = vpop.f32.mrb[0].mxu0
    %315 = vdwg.mxu0
    %v317 = vsel %vm155, %v123, 0
    %v320 = vsel %vm155, %v124, 0
    %322 = vmatprep.subr.mxu0 0.0
    %323 = vmatpush1.msra.mxu0 %v228
    %324 = vmatprep.subr.mxu0 0.0
    %325 = vmatpush1.msra.mxu0 %v229
    %326 = vmatprep.subr.mxu0 0.0
    %327 = vmatpush1.msra.mxu0 %v230
    %328 = vmatprep.subr.mxu0 0.0
    %329 = vmatpush1.msra.mxu0 %v231
    %330 = vmatprep.subr.mxu0 0.0
    %331 = vmatpush1.msra.mxu0 0.0
    %332 = vmatprep.subr.mxu0 0.0
    %333 = vmatpush1.msra.mxu0 0.0
    %334 = vmatprep.subr.mxu0 0.0
    %335 = vmatpush1.msra.mxu0 0.0
    %336 = vmatprep.subr.mxu0 0.0
    %337 = vmatpush1.msra.mxu0 0.0
    %338 = vmatprep.subr.mxu0 0.0
    %339 = vmatpush1.msra.mxu0 0.0
    %340 = vmatprep.subr.mxu0 0.0
    %341 = vmatpush1.msra.mxu0 0.0
    %342 = vmatprep.subr.mxu0 0.0
    %343 = vmatpush1.msra.mxu0 0.0
    %344 = vmatprep.subr.mxu0 0.0
    %345 = vmatpush1.msra.mxu0 0.0
    %346 = vmatprep.subr.mxu0 0.0
    %347 = vmatpush1.msra.mxu0 0.0
    %348 = vmatprep.subr.mxu0 0.0
    %349 = vmatpush1.msra.mxu0 0.0
    %350 = vmatprep.subr.mxu0 0.0
    %351 = vmatpush1.msra.mxu0 0.0
    %352 = vmatprep.subr.mxu0 0.0
    %353 = vmatpush1.msra.mxu0 0.0
    %354 = vmatprep.subr.mxu0 0.0
    %355 = vmatpush1.msra.mxu0 0.0
    %356 = vmatprep.subr.mxu0 0.0
    %357 = vmatpush1.msra.mxu0 0.0
    %358 = vmatprep.subr.mxu0 0.0
    %359 = vmatpush1.msra.mxu0 0.0
    %360 = vmatprep.subr.mxu0 0.0
    %361 = vmatpush1.msra.mxu0 0.0
    %362 = vmatprep.subr.mxu0 0.0
    %363 = vmatpush1.msra.mxu0 0.0
    %364 = vmatprep.subr.mxu0 0.0
    %365 = vmatpush1.msra.mxu0 0.0
    %366 = vmatprep.subr.mxu0 0.0
    %367 = vmatpush1.msra.mxu0 0.0
    %368 = vmatprep.subr.mxu0 0.0
    %369 = vmatpush1.msra.mxu0 0.0
    %370 = vmatprep.subr.mxu0 0.0
    %371 = vmatpush1.msra.mxu0 0.0
    %372 = vmatprep.subr.mxu0 0.0
    %373 = vmatpush1.msra.mxu0 0.0
    %374 = vmatprep.subr.mxu0 0.0
    %375 = vmatpush1.msra.mxu0 0.0
    %376 = vmatprep.subr.mxu0 0.0
    %377 = vmatpush1.msra.mxu0 0.0
    %378 = vmatprep.subr.mxu0 0.0
    %379 = vmatpush1.msra.mxu0 0.0
    %380 = vmatprep.subr.mxu0 0.0
    %381 = vmatpush1.msra.mxu0 0.0
    %382 = vmatprep.subr.mxu0 0.0
    %383 = vmatpush1.msra.mxu0 0.0
    %384 = vmatprep.subr.mxu0 0.0
    %385 = vmatpush1.msra.mxu0 0.0
    %386 = vmatprep.mubr.f32.mxu0 0.0
    %387 = vmatmul.mubr.f32.gmra.mrb[0].mxu0 %v317
    %v388 = vpop.f32.mrb[0].mxu0
    %v389 = vadd.f32 %v308, %v388
    %v390 = vpop.f32.mrb[0].mxu0
    %391 = vmatprep.mubr.f32.mxu0 0.0
    %392 = vmatmul.mubr.f32.gmra.mrb[0].mxu0 %v320
    %v393 = vpop.f32.mrb[0].mxu0
    %v394 = vadd.f32 %v313, %v393
    %v395 = vpop.f32.mrb[0].mxu0
    %396 = vdwg.mxu0
    %v397 = vld [vmem:[%s7] sm:$0x1]
    %v399 = vlaneseq
    %v400 = vshrl.u32 %v399, 7
    %v401 = vsub.s32 0, %v400
    %v402 = vrot.slane %v397, %v401
    %v404 = vadd.f32 %v389, %v402
    %v405 = vadd.f32 %v394, %v402
    %v406 = vld [vmem:[#allocation11] sm:$0xff]
    %v407 = vld [vmem:[#allocation11 + $0x8] sm:$0xff]
    %v408 = vld [vmem:[#allocation11 + $0x10] sm:$0xff]
    %v409 = vld [vmem:[#allocation11 + $0x18] sm:$0xff]
    %v410 = vld [vmem:[%s9] sm:$0xff]
    %v411 = vld [vmem:[%s9 + $0x8] sm:$0xff]
    %412 = vmatprep.subr.mxu0 0.0
    %413 = vmatpush1.msra.mxu0 %v410
    %414 = vmatprep.subr.mxu0 0.0
    %415 = vmatpush1.msra.mxu0 %v411
    %416 = vmatprep.subr.mxu0 0.0
    %417 = vmatpush1.msra.mxu0 0.0
    %418 = vmatprep.subr.mxu0 0.0
    %419 = vmatpush1.msra.mxu0 0.0
    %420 = vmatprep.subr.mxu0 0.0
    %421 = vmatpush1.msra.mxu0 0.0
    %422 = vmatprep.subr.mxu0 0.0
    %423 = vmatpush1.msra.mxu0 0.0
    %424 = vmatprep.subr.mxu0 0.0
    %425 = vmatpush1.msra.mxu0 0.0
    %426 = vmatprep.subr.mxu0 0.0
    %427 = vmatpush1.msra.mxu0 0.0
    %428 = vmatprep.subr.mxu0 0.0
    %429 = vmatpush1.msra.mxu0 0.0
    %430 = vmatprep.subr.mxu0 0.0
    %431 = vmatpush1.msra.mxu0 0.0
    %432 = vmatprep.subr.mxu0 0.0
    %433 = vmatpush1.msra.mxu0 0.0
    %434 = vmatprep.subr.mxu0 0.0
    %435 = vmatpush1.msra.mxu0 0.0
    %436 = vmatprep.subr.mxu0 0.0
    %437 = vmatpush1.msra.mxu0 0.0
    %438 = vmatprep.subr.mxu0 0.0
    %439 = vmatpush1.msra.mxu0 0.0
    %440 = vmatprep.subr.mxu0 0.0
    %441 = vmatpush1.msra.mxu0 0.0
    %442 = vmatprep.subr.mxu0 0.0
    %443 = vmatpush1.msra.mxu0 0.0
    %444 = vmatprep.subr.mxu0 0.0
    %445 = vmatpush1.msra.mxu0 0.0
    %446 = vmatprep.subr.mxu0 0.0
    %447 = vmatpush1.msra.mxu0 0.0
    %448 = vmatprep.subr.mxu0 0.0
    %449 = vmatpush1.msra.mxu0 0.0
    %450 = vmatprep.subr.mxu0 0.0
    %451 = vmatpush1.msra.mxu0 0.0
    %452 = vmatprep.subr.mxu0 0.0
    %453 = vmatpush1.msra.mxu0 0.0
    %454 = vmatprep.subr.mxu0 0.0
    %455 = vmatpush1.msra.mxu0 0.0
    %456 = vmatprep.subr.mxu0 0.0
    %457 = vmatpush1.msra.mxu0 0.0
    %458 = vmatprep.subr.mxu0 0.0
    %459 = vmatpush1.msra.mxu0 0.0
    %460 = vmatprep.subr.mxu0 0.0
    %461 = vmatpush1.msra.mxu0 0.0
    %462 = vmatprep.subr.mxu0 0.0
    %463 = vmatpush1.msra.mxu0 0.0
    %464 = vmatprep.subr.mxu0 0.0
    %465 = vmatpush1.msra.mxu0 0.0
    %466 = vmatprep.subr.mxu0 0.0
    %467 = vmatpush1.msra.mxu0 0.0
    %468 = vmatprep.subr.mxu0 0.0
    %469 = vmatpush1.msra.mxu0 0.0
    %470 = vmatprep.subr.mxu0 0.0
    %471 = vmatpush1.msra.mxu0 0.0
    %472 = vmatprep.subr.mxu0 0.0
    %473 = vmatpush1.msra.mxu0 0.0
    %474 = vmatprep.subr.mxu0 0.0
    %475 = vmatpush1.msra.mxu0 0.0
    %476 = vmatprep.mubr.f32.mxu0 0.0
    %477 = vmatmul.mubr.f32.gmra.mrb[0].mxu0 %v236
    %v478 = vpop.f32.mrb[0].mxu0
    %v479 = vadd.f32 0.0, %v478
    %v480 = vpop.f32.mrb[0].mxu0
    %481 = vmatprep.mubr.f32.mxu0 0.0
    %482 = vmatmul.mubr.f32.gmra.mrb[0].mxu0 %v239
    %v483 = vpop.f32.mrb[0].mxu0
    %v484 = vadd.f32 0.0, %v483
    %v485 = vpop.f32.mrb[0].mxu0
    %486 = vdwg.mxu0
    %487 = vmatprep.subr.mxu0 0.0
    %488 = vmatpush1.msra.mxu0 %v406
    %489 = vmatprep.subr.mxu0 0.0
    %490 = vmatpush1.msra.mxu0 %v407
    %491 = vmatprep.subr.mxu0 0.0
    %492 = vmatpush1.msra.mxu0 %v408
    %493 = vmatprep.subr.mxu0 0.0
    %494 = vmatpush1.msra.mxu0 %v409
    %495 = vmatprep.subr.mxu0 0.0
    %496 = vmatpush1.msra.mxu0 0.0
    %497 = vmatprep.subr.mxu0 0.0
    %498 = vmatpush1.msra.mxu0 0.0
    %499 = vmatprep.subr.mxu0 0.0
    %500 = vmatpush1.msra.mxu0 0.0
    %501 = vmatprep.subr.mxu0 0.0
    %502 = vmatpush1.msra.mxu0 0.0
    %503 = vmatprep.subr.mxu0 0.0
    %504 = vmatpush1.msra.mxu0 0.0
    %505 = vmatprep.subr.mxu0 0.0
    %506 = vmatpush1.msra.mxu0 0.0
    %507 = vmatprep.subr.mxu0 0.0
    %508 = vmatpush1.msra.mxu0 0.0
    %509 = vmatprep.subr.mxu0 0.0
    %510 = vmatpush1.msra.mxu0 0.0
    %511 = vmatprep.subr.mxu0 0.0
    %512 = vmatpush1.msra.mxu0 0.0
    %513 = vmatprep.subr.mxu0 0.0
    %514 = vmatpush1.msra.mxu0 0.0
    %515 = vmatprep.subr.mxu0 0.0
    %516 = vmatpush1.msra.mxu0 0.0
    %517 = vmatprep.subr.mxu0 0.0
    %518 = vmatpush1.msra.mxu0 0.0
    %519 = vmatprep.subr.mxu0 0.0
    %520 = vmatpush1.msra.mxu0 0.0
    %521 = vmatprep.subr.mxu0 0.0
    %522 = vmatpush1.msra.mxu0 0.0
    %523 = vmatprep.subr.mxu0 0.0
    %524 = vmatpush1.msra.mxu0 0.0
    %525 = vmatprep.subr.mxu0 0.0
    %526 = vmatpush1.msra.mxu0 0.0
    %527 = vmatprep.subr.mxu0 0.0
    %528 = vmatpush1.msra.mxu0 0.0
    %529 = vmatprep.subr.mxu0 0.0
    %530 = vmatpush1.msra.mxu0 0.0
    %531 = vmatprep.subr.mxu0 0.0
    %532 = vmatpush1.msra.mxu0 0.0
    %533 = vmatprep.subr.mxu0 0.0
    %534 = vmatpush1.msra.mxu0 0.0
    %535 = vmatprep.subr.mxu0 0.0
    %536 = vmatpush1.msra.mxu0 0.0
    %537 = vmatprep.subr.mxu0 0.0
    %538 = vmatpush1.msra.mxu0 0.0
    %539 = vmatprep.subr.mxu0 0.0
    %540 = vmatpush1.msra.mxu0 0.0
    %541 = vmatprep.subr.mxu0 0.0
    %542 = vmatpush1.msra.mxu0 0.0
    %543 = vmatprep.subr.mxu0 0.0
    %544 = vmatpush1.msra.mxu0 0.0
    %545 = vmatprep.subr.mxu0 0.0
    %546 = vmatpush1.msra.mxu0 0.0
    %547 = vmatprep.subr.mxu0 0.0
    %548 = vmatpush1.msra.mxu0 0.0
    %549 = vmatprep.subr.mxu0 0.0
    %550 = vmatpush1.msra.mxu0 0.0
    %551 = vmatprep.mubr.f32.mxu0 0.0
    %552 = vmatmul.mubr.f32.gmra.mrb[0].mxu0 %v317
    %v553 = vpop.f32.mrb[0].mxu0
    %v554 = vadd.f32 %v479, %v553
    %v555 = vpop.f32.mrb[0].mxu0
    %556 = vmatprep.mubr.f32.mxu0 0.0
    %557 = vmatmul.mubr.f32.gmra.mrb[0].mxu0 %v320
    %v558 = vpop.f32.mrb[0].mxu0
    %v559 = vadd.f32 %v484, %v558
    %v560 = vpop.f32.mrb[0].mxu0
    %561 = vdwg.mxu0
    %v562 = vld [vmem:[%s10] sm:$0x1]
    %v564 = vlaneseq
    %v565 = vshrl.u32 %v564, 7
    %v566 = vsub.s32 0, %v565
    %v567 = vrot.slane %v562, %v566
    %v569 = vadd.f32 %v554, %v567
    %v570 = vadd.f32 %v559, %v567
    %v573 = vunpack.c.l.s4 1966171168
    %v574 = vunpack.c.0.s8 %v573
    %v575 = vlaneseq
    %v576 = vshrl.u32 %v575, 7
    %v577 = vsub.s32 %v574, %v576
    %v578 = vrot.slane %v225, %v577
    %v579 = vcombine.high %v578, %v578
    %v581 = vunpack.c.l.s4 1966171168
    %v582 = vunpack.c.0.s8 %v581
    %v583 = vlaneseq
    %v584 = vshrl.u32 %v583, 7
    %v585 = vsub.s32 %v582, %v584
    %v586 = vrot.slane %v578, %v585
    %v588 = vunpack.c.l.s4 1966171168
    %v589 = vunpack.c.0.s8 %v588
    %v590 = vlaneseq
    %v591 = vshrl.u32 %v590, 7
    %v592 = vsub.s32 %v589, %v591
    %v593 = vrot.slane %v579, %v592
    %596 = vmatprep.subr.mxu0 0.0
    %597 = vmatpush1.xpose.msra.mxu0 %v404
    %598 = vmatprep.subr.mxu0 0.0
    %599 = vmatpush1.xpose.msra.mxu0 0.0
    %600 = vmatprep.subr.mxu0 0.0
    %601 = vmatpush1.xpose.msra.mxu0 0.0
    %602 = vmatprep.subr.mxu0 0.0
    %603 = vmatpush1.xpose.msra.mxu0 0.0
    %604 = vmatprep.subr.mxu0 0.0
    %605 = vmatpush1.xpose.msra.mxu0 0.0
    %606 = vmatprep.subr.mxu0 0.0
    %607 = vmatpush1.xpose.msra.mxu0 0.0
    %608 = vmatprep.subr.mxu0 0.0
    %609 = vmatpush1.xpose.msra.mxu0 0.0
    %610 = vmatprep.subr.mxu0 0.0
    %611 = vmatpush1.xpose.msra.mxu0 0.0
    %612 = vmatprep.subr.mxu0 0.0
    %613 = vmatpush1.xpose.msra.mxu0 0.0
    %614 = vmatprep.subr.mxu0 0.0
    %615 = vmatpush1.xpose.msra.mxu0 0.0
    %616 = vmatprep.subr.mxu0 0.0
    %617 = vmatpush1.xpose.msra.mxu0 0.0
    %618 = vmatprep.subr.mxu0 0.0
    %619 = vmatpush1.xpose.msra.mxu0 0.0
    %620 = vmatprep.subr.mxu0 0.0
    %621 = vmatpush1.xpose.msra.mxu0 0.0
    %622 = vmatprep.subr.mxu0 0.0
    %623 = vmatpush1.xpose.msra.mxu0 0.0
    %624 = vmatprep.subr.mxu0 0.0
    %625 = vmatpush1.xpose.msra.mxu0 0.0
    %626 = vmatprep.subr.mxu0 0.0
    %627 = vmatpush1.xpose.msra.mxu0 0.0
    %628 = vmatprep.subr.mxu0 0.0
    %629 = vmatpush1.xpose.msra.mxu0 0.0
    %630 = vmatprep.subr.mxu0 0.0
    %631 = vmatpush1.xpose.msra.mxu0 0.0
    %632 = vmatprep.subr.mxu0 0.0
    %633 = vmatpush1.xpose.msra.mxu0 0.0
    %634 = vmatprep.subr.mxu0 0.0
    %635 = vmatpush1.xpose.msra.mxu0 0.0
    %636 = vmatprep.subr.mxu0 0.0
    %637 = vmatpush1.xpose.msra.mxu0 0.0
    %638 = vmatprep.subr.mxu0 0.0
    %639 = vmatpush1.xpose.msra.mxu0 0.0
    %640 = vmatprep.subr.mxu0 0.0
    %641 = vmatpush1.xpose.msra.mxu0 0.0
    %642 = vmatprep.subr.mxu0 0.0
    %643 = vmatpush1.xpose.msra.mxu0 0.0
    %644 = vmatprep.subr.mxu0 0.0
    %645 = vmatpush1.xpose.msra.mxu0 0.0
    %646 = vmatprep.subr.mxu0 0.0
    %647 = vmatpush1.xpose.msra.mxu0 0.0
    %648 = vmatprep.subr.mxu0 0.0
    %649 = vmatpush1.xpose.msra.mxu0 0.0
    %650 = vmatprep.subr.mxu0 0.0
    %651 = vmatpush1.xpose.msra.mxu0 0.0
    %652 = vmatprep.subr.mxu0 0.0
    %653 = vmatpush1.xpose.msra.mxu0 0.0
    %654 = vmatprep.subr.mxu0 0.0
    %655 = vmatpush1.xpose.msra.mxu0 0.0
    %656 = vmatprep.subr.mxu0 0.0
    %657 = vmatpush1.xpose.msra.mxu0 0.0
    %658 = vmatprep.subr.mxu0 0.0
    %659 = vmatpush1.xpose.msra.mxu0 0.0
    %660 = vmatprep.mubr.f32.mxu0 0.0
    %661 = vmatmul.mubr.f32.gmra.mrb[0].mxu0 %v586
    %v662 = vpop.f32.mrb[0].mxu0
    %v663 = vadd.f32 0.0, %v662
    %v664 = vpop.f32.mrb[0].mxu0
    %665 = vdwg.mxu0
    %666 = vmatprep.subr.mxu0 0.0
    %667 = vmatpush1.xpose.msra.mxu0 %v405
    %668 = vmatprep.subr.mxu0 0.0
    %669 = vmatpush1.xpose.msra.mxu0 0.0
    %670 = vmatprep.subr.mxu0 0.0
    %671 = vmatpush1.xpose.msra.mxu0 0.0
    %672 = vmatprep.subr.mxu0 0.0
    %673 = vmatpush1.xpose.msra.mxu0 0.0
    %674 = vmatprep.subr.mxu0 0.0
    %675 = vmatpush1.xpose.msra.mxu0 0.0
    %676 = vmatprep.subr.mxu0 0.0
    %677 = vmatpush1.xpose.msra.mxu0 0.0
    %678 = vmatprep.subr.mxu0 0.0
    %679 = vmatpush1.xpose.msra.mxu0 0.0
    %680 = vmatprep.subr.mxu0 0.0
    %681 = vmatpush1.xpose.msra.mxu0 0.0
    %682 = vmatprep.subr.mxu0 0.0
    %683 = vmatpush1.xpose.msra.mxu0 0.0
    %684 = vmatprep.subr.mxu0 0.0
    %685 = vmatpush1.xpose.msra.mxu0 0.0
    %686 = vmatprep.subr.mxu0 0.0
    %687 = vmatpush1.xpose.msra.mxu0 0.0
    %688 = vmatprep.subr.mxu0 0.0
    %689 = vmatpush1.xpose.msra.mxu0 0.0
    %690 = vmatprep.subr.mxu0 0.0
    %691 = vmatpush1.xpose.msra.mxu0 0.0
    %692 = vmatprep.subr.mxu0 0.0
    %693 = vmatpush1.xpose.msra.mxu0 0.0
    %694 = vmatprep.subr.mxu0 0.0
    %695 = vmatpush1.xpose.msra.mxu0 0.0
    %696 = vmatprep.subr.mxu0 0.0
    %697 = vmatpush1.xpose.msra.mxu0 0.0
    %698 = vmatprep.subr.mxu0 0.0
    %699 = vmatpush1.xpose.msra.mxu0 0.0
    %700 = vmatprep.subr.mxu0 0.0
    %701 = vmatpush1.xpose.msra.mxu0 0.0
    %702 = vmatprep.subr.mxu0 0.0
    %703 = vmatpush1.xpose.msra.mxu0 0.0
    %704 = vmatprep.subr.mxu0 0.0
    %705 = vmatpush1.xpose.msra.mxu0 0.0
    %706 = vmatprep.subr.mxu0 0.0
    %707 = vmatpush1.xpose.msra.mxu0 0.0
    %708 = vmatprep.subr.mxu0 0.0
    %709 = vmatpush1.xpose.msra.mxu0 0.0
    %710 = vmatprep.subr.mxu0 0.0
    %711 = vmatpush1.xpose.msra.mxu0 0.0
    %712 = vmatprep.subr.mxu0 0.0
    %713 = vmatpush1.xpose.msra.mxu0 0.0
    %714 = vmatprep.subr.mxu0 0.0
    %715 = vmatpush1.xpose.msra.mxu0 0.0
    %716 = vmatprep.subr.mxu0 0.0
    %717 = vmatpush1.xpose.msra.mxu0 0.0
    %718 = vmatprep.subr.mxu0 0.0
    %719 = vmatpush1.xpose.msra.mxu0 0.0
    %720 = vmatprep.subr.mxu0 0.0
    %721 = vmatpush1.xpose.msra.mxu0 0.0
    %722 = vmatprep.subr.mxu0 0.0
    %723 = vmatpush1.xpose.msra.mxu0 0.0
    %724 = vmatprep.subr.mxu0 0.0
    %725 = vmatpush1.xpose.msra.mxu0 0.0
    %726 = vmatprep.subr.mxu0 0.0
    %727 = vmatpush1.xpose.msra.mxu0 0.0
    %728 = vmatprep.subr.mxu0 0.0
    %729 = vmatpush1.xpose.msra.mxu0 0.0
    %730 = vmatprep.mubr.f32.mxu0 0.0
    %731 = vmatmul.mubr.f32.gmra.mrb[0].mxu0 %v593
    %v732 = vpop.f32.mrb[0].mxu0
    %v733 = vadd.f32 0.0, %v732
    %v734 = vpop.f32.mrb[0].mxu0
    %735 = vdwg.mxu0
    %v736 = vmul.f32 %v663, 0.17677669
    %v737 = vmul.f32 %v733, 0.17677669
    %vm738 = vcmask 57344
    %v739 = vsel %vm738, %v736, -inf
    %740 = vmax.xlane.f32.xlu0 %v739
    %v741 = vpop.xlane.xlu0 %740
    %v742 = vsel %vm738, %v737, -inf
    %743 = vmax.xlane.f32.xlu0 %v742
    %v744 = vpop.xlane.xlu0 %743
    %v745 = vsub.f32 %v736, %v741
    %v746 = vsub.f32 %v737, %v744
    %v747 = vmul.f32 %v745, 1.442695
    %v748 = vpow.pop %v747
    %v749 = vmul.f32 %v746, 1.442695
    %v750 = vpow.pop %v749
    %v751 = vsel %vm738, %v748, 0.0
    %752 = vadd.xlane.f32.xlu0 %v751
    %v753 = vpop.xlane.xlu0 %752
    %v754 = vsel %vm738, %v750, 0.0
    %755 = vadd.xlane.f32.xlu0 %v754
    %v756 = vpop.xlane.xlu0 %755
    %v757 = vrcp.pop %v753
    %v758 = vrcp.pop %v756
    %v759 = vmul.f32 %v748, %v757
    %v760 = vmul.f32 %v750, %v758
    %vm761 = vcmask 64512
    %v763 = vsel %vm761, %v759, 0
    %765 = vmatprep.subr.mxu0 0.0
    %766 = vmatpush1.msra.mxu0 %v569
    %767 = vmatprep.subr.mxu0 0.0
    %768 = vmatpush1.msra.mxu0 0.0
    %769 = vmatprep.subr.mxu0 0.0
    %770 = vmatpush1.msra.mxu0 0.0
    %771 = vmatprep.subr.mxu0 0.0
    %772 = vmatpush1.msra.mxu0 0.0
    %773 = vmatprep.subr.mxu0 0.0
    %774 = vmatpush1.msra.mxu0 0.0
    %775 = vmatprep.subr.mxu0 0.0
    %776 = vmatpush1.msra.mxu0 0.0
    %777 = vmatprep.subr.mxu0 0.0
    %778 = vmatpush1.msra.mxu0 0.0
    %779 = vmatprep.subr.mxu0 0.0
    %780 = vmatpush1.msra.mxu0 0.0
    %781 = vmatprep.subr.mxu0 0.0
    %782 = vmatpush1.msra.mxu0 0.0
    %783 = vmatprep.subr.mxu0 0.0
    %784 = vmatpush1.msra.mxu0 0.0
    %785 = vmatprep.subr.mxu0 0.0
    %786 = vmatpush1.msra.mxu0 0.0
    %787 = vmatprep.subr.mxu0 0.0
    %788 = vmatpush1.msra.mxu0 0.0
    %789 = vmatprep.subr.mxu0 0.0
    %790 = vmatpush1.msra.mxu0 0.0
    %791 = vmatprep.subr.mxu0 0.0
    %792 = vmatpush1.msra.mxu0 0.0
    %793 = vmatprep.subr.mxu0 0.0
    %794 = vmatpush1.msra.mxu0 0.0
    %795 = vmatprep.subr.mxu0 0.0
    %796 = vmatpush1.msra.mxu0 0.0
    %797 = vmatprep.subr.mxu0 0.0
    %798 = vmatpush1.msra.mxu0 0.0
    %799 = vmatprep.subr.mxu0 0.0
    %800 = vmatpush1.msra.mxu0 0.0
    %801 = vmatprep.subr.mxu0 0.0
    %802 = vmatpush1.msra.mxu0 0.0
    %803 = vmatprep.subr.mxu0 0.0
    %804 = vmatpush1.msra.mxu0 0.0
    %805 = vmatprep.subr.mxu0 0.0
    %806 = vmatpush1.msra.mxu0 0.0
    %807 = vmatprep.subr.mxu0 0.0
    %808 = vmatpush1.msra.mxu0 0.0
    %809 = vmatprep.subr.mxu0 0.0
    %810 = vmatpush1.msra.mxu0 0.0
    %811 = vmatprep.subr.mxu0 0.0
    %812 = vmatpush1.msra.mxu0 0.0
    %813 = vmatprep.subr.mxu0 0.0
    %814 = vmatpush1.msra.mxu0 0.0
    %815 = vmatprep.subr.mxu0 0.0
    %816 = vmatpush1.msra.mxu0 0.0
    %817 = vmatprep.subr.mxu0 0.0
    %818 = vmatpush1.msra.mxu0 0.0
    %819 = vmatprep.subr.mxu0 0.0
    %820 = vmatpush1.msra.mxu0 0.0
    %821 = vmatprep.subr.mxu0 0.0
    %822 = vmatpush1.msra.mxu0 0.0
    %823 = vmatprep.subr.mxu0 0.0
    %824 = vmatpush1.msra.mxu0 0.0
    %825 = vmatprep.subr.mxu0 0.0
    %826 = vmatpush1.msra.mxu0 0.0
    %827 = vmatprep.subr.mxu0 0.0
    %828 = vmatpush1.msra.mxu0 0.0
    %829 = vmatprep.mubr.f32.mxu0 0.0
    %830 = vmatmul.mubr.f32.gmra.mrb[0].mxu0 %v763
    %v831 = vpop.f32.mrb[0].mxu0
    %v832 = vadd.f32 0.0, %v831
    %v833 = vpop.f32.mrb[0].mxu0
    %834 = vdwg.mxu0
    %v836 = vsel %vm761, %v760, 0
    %838 = vmatprep.subr.mxu0 0.0
    %839 = vmatpush1.msra.mxu0 %v570
    %840 = vmatprep.subr.mxu0 0.0
    %841 = vmatpush1.msra.mxu0 0.0
    %842 = vmatprep.subr.mxu0 0.0
    %843 = vmatpush1.msra.mxu0 0.0
    %844 = vmatprep.subr.mxu0 0.0
    %845 = vmatpush1.msra.mxu0 0.0
    %846 = vmatprep.subr.mxu0 0.0
    %847 = vmatpush1.msra.mxu0 0.0
    %848 = vmatprep.subr.mxu0 0.0
    %849 = vmatpush1.msra.mxu0 0.0
    %850 = vmatprep.subr.mxu0 0.0
    %851 = vmatpush1.msra.mxu0 0.0
    %852 = vmatprep.subr.mxu0 0.0
    %853 = vmatpush1.msra.mxu0 0.0
    %854 = vmatprep.subr.mxu0 0.0
    %855 = vmatpush1.msra.mxu0 0.0
    %856 = vmatprep.subr.mxu0 0.0
    %857 = vmatpush1.msra.mxu0 0.0
    %858 = vmatprep.subr.mxu0 0.0
    %859 = vmatpush1.msra.mxu0 0.0
    %860 = vmatprep.subr.mxu0 0.0
    %861 = vmatpush1.msra.mxu0 0.0
    %862 = vmatprep.subr.mxu0 0.0
    %863 = vmatpush1.msra.mxu0 0.0
    %864 = vmatprep.subr.mxu0 0.0
    %865 = vmatpush1.msra.mxu0 0.0
    %866 = vmatprep.subr.mxu0 0.0
    %867 = vmatpush1.msra.mxu0 0.0
    %868 = vmatprep.subr.mxu0 0.0
    %869 = vmatpush1.msra.mxu0 0.0
    %870 = vmatprep.subr.mxu0 0.0
    %871 = vmatpush1.msra.mxu0 0.0
    %872 = vmatprep.subr.mxu0 0.0
    %873 = vmatpush1.msra.mxu0 0.0
    %874 = vmatprep.subr.mxu0 0.0
    %875 = vmatpush1.msra.mxu0 0.0
    %876 = vmatprep.subr.mxu0 0.0
    %877 = vmatpush1.msra.mxu0 0.0
    %878 = vmatprep.subr.mxu0 0.0
    %879 = vmatpush1.msra.mxu0 0.0
    %880 = vmatprep.subr.mxu0 0.0
    %881 = vmatpush1.msra.mxu0 0.0
    %882 = vmatprep.subr.mxu0 0.0
    %883 = vmatpush1.msra.mxu0 0.0
    %884 = vmatprep.subr.mxu0 0.0
    %885 = vmatpush1.msra.mxu0 0.0
    %886 = vmatprep.subr.mxu0 0.0
    %887 = vmatpush1.msra.mxu0 0.0
    %888 = vmatprep.subr.mxu0 0.0
    %889 = vmatpush1.msra.mxu0 0.0
    %890 = vmatprep.subr.mxu0 0.0
    %891 = vmatpush1.msra.mxu0 0.0
    %892 = vmatprep.subr.mxu0 0.0
    %893 = vmatpush1.msra.mxu0 0.0
    %894 = vmatprep.subr.mxu0 0.0
    %895 = vmatpush1.msra.mxu0 0.0
    %896 = vmatprep.subr.mxu0 0.0
    %897 = vmatpush1.msra.mxu0 0.0
    %898 = vmatprep.subr.mxu0 0.0
    %899 = vmatpush1.msra.mxu0 0.0
    %900 = vmatprep.subr.mxu0 0.0
    %901 = vmatpush1.msra.mxu0 0.0
    %902 = vmatprep.mubr.f32.mxu0 0.0
    %903 = vmatmul.mubr.f32.gmra.mrb[0].mxu0 %v836
    %v904 = vpop.f32.mrb[0].mxu0
    %v905 = vadd.f32 0.0, %v904
    %v906 = vpop.f32.mrb[0].mxu0
    %907 = vdwg.mxu0
    %908 = vst [vmem:[#allocation13] sm:$0x1] %v832
    %909 = vst [vmem:[#allocation13 + $0x1] sm:$0x1] %v905
    // Predicated region
    $region70: #{tpu_custom_call.1} parent=1 // pred_check
      _
    $region71: #{tpu_custom_call.1} parent=1 // pred_check_branch
      %911 = sbr.rel (0) target = $region73
    $region72: #{tpu_custom_call.1} parent=1 // pred_region
      %s913 = ssub.s32 32, 32
      %914 = vsyncadd [#allocation4], %s913
      %s915 = sshll.u32 [#allocation13], 4
      %s916 = int_to_ptr.vmem [resolvable:$true] %s915
      %921 = dma.vmem_to_hbm [thread:$0]  %s916, 32, %s11, [#allocation4], 16, 16, 1
    $region73: #{tpu_custom_call.1} parent=1 // pred_fallthru
      _
    // Predicated region
    $region74: #{tpu_custom_call.1} parent=1 // pred_check
      _
    $region75: #{tpu_custom_call.1} parent=1 // pred_check_branch
      %923 = sbr.rel (0) target = $region77
    $region76: #{tpu_custom_call.1} parent=1 // pred_region
      %924 = dma.done [#allocation4], 32
    $region77: #{tpu_custom_call.1} parent=1 // pred_fallthru
      _
    %925 = vsyncpa [#allocation3], 1
    %926 = vsyncpa [#allocation6], 1
    %927 = vsyncpa [#allocation9], 1
    %928 = vsyncpa [#allocation12], 1
    %929 = vsyncpa [#allocation4], 1

</llo_original>
